<compile_context>
chip_gen: v7x
topology: tpu7x:2x2x1
jax: 0.10.0
libtpu: 0.0.40
codegen_flags: <defaults>
</compile_context>

<pallas_src>
import functools

import jax
import jax.numpy as jnp
from jax.experimental import pallas as pl
from jax.experimental.pallas import tpu as pltpu


def _adjust_size(a, b):
    t = min(a.shape[1], b.shape[1])
    return a[:, :t], b[:, :t]


def _world_loss_kernel(T,
                       length_ref,
                       hasf0_logits_ref, f0_hat_ref, logspc_hat_ref, codeap_hat_ref,
                       hasf0_ref, f0_ref, logspc_ref, codeap_ref,
                       acc_hasf0_ref, acc_f0_ref, acc_spc_ref, acc_cap_ref):
    ti = pl.program_id(0)

    # Output blocks have a constant index_map -> they stay resident in VMEM
    # across the whole grid and act as accumulators.
    @pl.when(ti == 0)
    def _init():
        acc_hasf0_ref[...] = jnp.zeros_like(acc_hasf0_ref)
        acc_f0_ref[...] = jnp.zeros_like(acc_f0_ref)
        acc_spc_ref[...] = jnp.zeros_like(acc_spc_ref)
        acc_cap_ref[...] = jnp.zeros_like(acc_cap_ref)

    B, tb = f0_ref.shape
    t0 = ti * tb
    t_idx = jax.lax.broadcasted_iota(jnp.int32, (B, tb), 1) + t0
    # padding mask (t < length) AND guard against the partial last tile
    # (t < T): jnp.where below selects 0.0 so stale/garbage data in the
    # out-of-range rows of the VMEM block can never propagate (even NaN/Inf).
    valid = (t_idx < length_ref[...]) & (t_idx < T)

    # --- BCEWithLogitsLoss(reduction='none') * mask -------------------------
    x = hasf0_logits_ref[...].astype(jnp.float32)
    y = hasf0_ref[...].astype(jnp.float32)
    bce = jnp.maximum(x, 0.0) - x * y + jnp.log1p(jnp.exp(-jnp.abs(x)))
    acc_hasf0_ref[...] += jnp.where(valid, bce, 0.0)

    # --- MSE(f0_hat, f0) * hasf0 * mask --------------------------------------
    f0d = f0_hat_ref[...].astype(jnp.float32) - f0_ref[...].astype(jnp.float32)
    acc_f0_ref[...] += jnp.where(valid, f0d * f0d * y, 0.0)

    # --- sum over spectral dim of MSE(logspc_hat, logspc), masked ------------
    # (divide by D_spc in the wrapper: sum/D == mean)
    sd = logspc_hat_ref[...].astype(jnp.float32) - logspc_ref[...].astype(jnp.float32)
    acc_spc_ref[...] += jnp.where(valid, jnp.sum(sd * sd, axis=2), 0.0)

    # --- sum over codeap dim of MSE(codeap_hat, codeap), masked --------------
    cd = codeap_hat_ref[...].astype(jnp.float32) - codeap_ref[...].astype(jnp.float32)
    acc_cap_ref[...] += jnp.where(valid, jnp.sum(cd * cd, axis=2), 0.0)


def _round_up(x, m):
    return ((x + m - 1) // m) * m


def _padded_bytes_per_frame(tensors, B):
    """VMEM bytes per time-frame of one buffer set, with lane padding of
    trailing dims to 128 (how the tile actually sits in VMEM)."""
    total = 0
    for a in tensors:
        if a.ndim == 3:
            lanes = _round_up(a.shape[2], 128)
            total += B * lanes * a.dtype.itemsize
        else:
            # 2-D [B, T]: T is on lanes (tile is a multiple of 128), B on
            # sublanes (padded to 8 -> negligible, counted exactly below).
            total += max(B, 8) * a.dtype.itemsize
    return total


def _pick_t_block(T, tensors, B, max_t_block, vmem_budget_bytes):
    """Largest time tile (multiple of 128, capped) whose double-buffered
    padded footprint (+ resident f32 accumulators) stays within the VMEM
    budget; full T if it already fits."""
    per_frame = 2 * _padded_bytes_per_frame(tensors, B)   # double-buffered
    per_frame += 4 * max(B, 8) * 4                         # 4 resident f32 accs
    cap = vmem_budget_bytes // max(1, per_frame)
    cap = min(cap, 1024)
    if max_t_block is not None:
        cap = min(cap, max_t_block)
    cap = max(128, (cap // 128) * 128)
    return T if T <= cap else cap


def world_loss(length, hasf0_logits, f0_hat, logspc_hat, codeap_hat,
               hasf0, f0, logspc, codeap,
               *, max_t_block=None, vmem_budget_bytes=24 << 20):
    # static-shape trimming (adjust_size) -- pure slicing, no data movement.
    hasf0_logits, hasf0 = _adjust_size(hasf0_logits, hasf0)
    f0_hat, f0 = _adjust_size(f0_hat, f0)
    logspc_hat, logspc = _adjust_size(logspc_hat, logspc)
    codeap_hat, codeap = _adjust_size(codeap_hat, codeap)

    B, T = f0.shape
    D_spc = logspc.shape[2]
    D_cap = codeap.shape[2]

    length = jnp.asarray(length).astype(jnp.int32)
    length2d = length.reshape(B, 1)

    tensors = (hasf0_logits, f0_hat, logspc_hat, codeap_hat,
               hasf0, f0, logspc, codeap)
    t_blk = _pick_t_block(T, tensors, B, max_t_block, vmem_budget_bytes)
    nt = pl.cdiv(T, t_blk)

    spec_2d = pl.BlockSpec((B, t_blk), lambda t: (0, t))
    spec_spc = pl.BlockSpec((B, t_blk, D_spc), lambda t: (0, t, 0))
    spec_cap = pl.BlockSpec((B, t_blk, D_cap), lambda t: (0, t, 0))
    spec_len = pl.BlockSpec((B, 1), lambda t: (0, 0))
    spec_acc = pl.BlockSpec((B, t_blk), lambda t: (0, 0))   # resident accumulator

    in_bytes = length2d.size * length2d.dtype.itemsize + sum(
        a.size * a.dtype.itemsize for a in tensors)
    out_bytes = 4 * B * t_blk * 4
    cost = pl.CostEstimate(
        flops=int(B * T * (12 + 3 * D_spc + 3 * D_cap)),
        transcendentals=int(2 * B * T),
        bytes_accessed=int(in_bytes + out_bytes),
    )

    acc = pl.pallas_call(
        functools.partial(_world_loss_kernel, T),
        grid=(nt,),
        in_specs=[spec_len,
                  spec_2d, spec_2d, spec_spc, spec_cap,
                  spec_2d, spec_2d, spec_spc, spec_cap],
        out_specs=(spec_acc, spec_acc, spec_acc, spec_acc),
        out_shape=tuple(jax.ShapeDtypeStruct((B, t_blk), jnp.float32)
                        for _ in range(4)),
        compiler_params=pltpu.CompilerParams(
            dimension_semantics=("arbitrary",)),
        cost_estimate=cost,
    )(length2d, hasf0_logits, f0_hat, logspc_hat, codeap_hat,
      hasf0, f0, logspc, codeap)

    # Tiny final reduce + normalization (<= a few KiB) in plain JAX.
    # mask_sum == sum(arange(T) < length) == sum(clip(length, 0, T)).
    # Note: like the PyTorch reference, mask_sum == 0 yields NaN/Inf.
    mask_sum = jnp.sum(jnp.clip(length, 0, T)).astype(jnp.float32)
    inv = 1.0 / mask_sum
    hasf0_loss = jnp.sum(acc[0]) * inv
    f0_loss = jnp.sum(acc[1]) * inv
    logspc_loss = jnp.sum(acc[2]) * (inv / D_spc)
    codeap_loss = jnp.sum(acc[3]) * (inv / D_cap)
    return hasf0_loss, f0_loss, logspc_loss, codeap_loss


def _reference(length, hasf0_logits, f0_hat, logspc_hat, codeap_hat,
               hasf0, f0, logspc, codeap):
    # pure-JAX reference of the PyTorch forward (mse, no mel weights),
    # computed in f32 (matches the kernel's per-tile upcast).
    hasf0_logits, hasf0 = _adjust_size(hasf0_logits, hasf0)
    f0_hat, f0 = _adjust_size(f0_hat, f0)
    logspc_hat, logspc = _adjust_size(logspc_hat, logspc)
    codeap_hat, codeap = _adjust_size(codeap_hat, codeap)
    to32 = lambda a: a.astype(jnp.float32)
    hasf0_logits, f0_hat, logspc_hat, codeap_hat = map(
        to32, (hasf0_logits, f0_hat, logspc_hat, codeap_hat))
    hasf0, f0, logspc, codeap = map(to32, (hasf0, f0, logspc, codeap))
    B, T = f0.shape
    mask = (jnp.arange(T)[None, :] < length[:, None]).astype(jnp.float32)
    x, y = hasf0_logits, hasf0
    bce = jnp.maximum(x, 0.0) - x * y + jnp.log1p(jnp.exp(-jnp.abs(x)))
    ms = jnp.sum(mask)
    hasf0_loss = jnp.sum(bce * mask) / ms
    f0_loss = jnp.sum((f0_hat - f0) ** 2 * y * mask) / ms
    logspc_loss = jnp.sum(jnp.mean((logspc_hat - logspc) ** 2, axis=2) * mask) / ms
    codeap_loss = jnp.sum(jnp.mean((codeap_hat - codeap) ** 2, axis=2) * mask) / ms
    return hasf0_loss, f0_loss, logspc_loss, codeap_loss


def _run_case(key, B, T_hat, T_tgt, D_spc, D_cap, lengths,
              max_t_block=None, dtype=jnp.float32, rtol=1e-4, atol=1e-4):
    ks = jax.random.split(key, 8)
    length = jnp.array(lengths, dtype=jnp.int32)

    hasf0_logits = jax.random.normal(ks[0], (B, T_hat), jnp.float32).astype(dtype)
    f0_hat = jax.random.normal(ks[1], (B, T_hat), jnp.float32).astype(dtype)
    logspc_hat = jax.random.normal(ks[2], (B, T_hat, D_spc), jnp.float32).astype(dtype)
    codeap_hat = jax.random.normal(ks[3], (B, T_hat, D_cap), jnp.float32).astype(dtype)

    hasf0 = jax.random.bernoulli(ks[4], 0.6, (B, T_tgt)).astype(dtype)
    f0 = (jax.random.normal(ks[5], (B, T_tgt), jnp.float32) * 100.0).astype(dtype)
    logspc = jax.random.normal(ks[6], (B, T_tgt, D_spc), jnp.float32).astype(dtype)
    codeap = jax.random.normal(ks[7], (B, T_tgt, D_cap), jnp.float32).astype(dtype)

    got = world_loss(length, hasf0_logits, f0_hat, logspc_hat, codeap_hat,
                     hasf0, f0, logspc, codeap, max_t_block=max_t_block)
    got = jax.block_until_ready(got)

    want = _reference(length, hasf0_logits, f0_hat, logspc_hat, codeap_hat,
                      hasf0, f0, logspc, codeap)
    for g, w in zip(got, want):
        assert jnp.allclose(g, w, rtol=rtol, atol=atol), (g, w)


if __name__ == "__main__":
    key = jax.random.PRNGKey(0)

    # small single-block case
    _run_case(jax.random.fold_in(key, 0),
              B=2, T_hat=10, T_tgt=8, D_spc=32, D_cap=4, lengths=[8, 5])

    # multi-block case: exercises the pipelined grid and the partial last tile
    _run_case(jax.random.fold_in(key, 1),
              B=2, T_hat=300, T_tgt=280, D_spc=64, D_cap=4,
              lengths=[250, 100], max_t_block=128)

    # bf16 streaming case: inputs stay bf16 in HBM, upcast happens in-kernel
    _run_case(jax.random.fold_in(key, 2),
              B=2, T_hat=260, T_tgt=256, D_spc=64, D_cap=4,
              lengths=[200, 256], max_t_block=128,
              dtype=jnp.bfloat16, rtol=1e-3, atol=1e-3)

    print("KERNEL_OK")
</pallas_src>

<mosaic_0001>
module attributes {stable_mosaic.version = 11 : i64} {
  func.func @_world_loss_kernel(%arg0: i32, %arg1: memref<2x1xi32, #tpu.memory_space<vmem>>, %arg2: memref<2x8xf32, #tpu.memory_space<vmem>>, %arg3: memref<2x8xf32, #tpu.memory_space<vmem>>, %arg4: memref<2x8x32xf32, #tpu.memory_space<vmem>>, %arg5: memref<2x8x4xf32, #tpu.memory_space<vmem>>, %arg6: memref<2x8xf32, #tpu.memory_space<vmem>>, %arg7: memref<2x8xf32, #tpu.memory_space<vmem>>, %arg8: memref<2x8x32xf32, #tpu.memory_space<vmem>>, %arg9: memref<2x8x4xf32, #tpu.memory_space<vmem>>, %arg10: memref<2x8xf32, #tpu.memory_space<vmem>>, %arg11: memref<2x8xf32, #tpu.memory_space<vmem>>, %arg12: memref<2x8xf32, #tpu.memory_space<vmem>>, %arg13: memref<2x8xf32, #tpu.memory_space<vmem>>) attributes {dimension_semantics = [#tpu.dimension_semantics<arbitrary>], iteration_bounds = array<i64: 1>, scalar_prefetch = 0 : i64, scratch_operands = 0 : i64, tpu.core_type = #tpu.core_type<tc>, window_params = [{pipeline_mode = #tpu.pipeline_mode<synchronous>, transform_indices = @transform_0, window_bounds = array<i64: 2, 1>}, {transform_indices = @transform_1, window_bounds = array<i64: 2, 8>}, {transform_indices = @transform_2, window_bounds = array<i64: 2, 8>}, {transform_indices = @transform_3, window_bounds = array<i64: 2, 8, 32>}, {transform_indices = @transform_4, window_bounds = array<i64: 2, 8, 4>}, {transform_indices = @transform_5, window_bounds = array<i64: 2, 8>}, {transform_indices = @transform_6, window_bounds = array<i64: 2, 8>}, {transform_indices = @transform_7, window_bounds = array<i64: 2, 8, 32>}, {transform_indices = @transform_8, window_bounds = array<i64: 2, 8, 4>}, {pipeline_mode = #tpu.pipeline_mode<synchronous>, transform_indices = @transform_9, window_bounds = array<i64: 2, 8>}, {pipeline_mode = #tpu.pipeline_mode<synchronous>, transform_indices = @transform_10, window_bounds = array<i64: 2, 8>}, {pipeline_mode = #tpu.pipeline_mode<synchronous>, transform_indices = @transform_11, window_bounds = array<i64: 2, 8>}, {pipeline_mode = #tpu.pipeline_mode<synchronous>, transform_indices = @transform_12, window_bounds = array<i64: 2, 8>}]} {
    %c0_i32 = arith.constant 0 : i32
    %0 = arith.cmpi eq, %arg0, %c0_i32 : i32
    %1 = arith.extui %0 : i1 to i32
    %c0_i32_0 = arith.constant 0 : i32
    %2 = arith.cmpi ne, %1, %c0_i32_0 : i32
    scf.if %2 {
      %cst_46 = arith.constant 0.000000e+00 : f32
      %60 = vector.broadcast %cst_46 : f32 to vector<2x8xf32>
      %c0_47 = arith.constant 0 : index
      %c0_48 = arith.constant 0 : index
      %61 = vector.load %arg10[%c0_47, %c0_48] : memref<2x8xf32, #tpu.memory_space<vmem>>, vector<2x8xf32>
      tpu.vector_store %arg10[%c0_47, %c0_48], %60 {strides = array<i32>} : memref<2x8xf32, #tpu.memory_space<vmem>>, vector<2x8xf32>,
      %cst_49 = arith.constant 0.000000e+00 : f32
      %62 = vector.broadcast %cst_49 : f32 to vector<2x8xf32>
      %c0_50 = arith.constant 0 : index
      %c0_51 = arith.constant 0 : index
      %63 = vector.load %arg11[%c0_50, %c0_51] : memref<2x8xf32, #tpu.memory_space<vmem>>, vector<2x8xf32>
      tpu.vector_store %arg11[%c0_50, %c0_51], %62 {strides = array<i32>} : memref<2x8xf32, #tpu.memory_space<vmem>>, vector<2x8xf32>,
      %cst_52 = arith.constant 0.000000e+00 : f32
      %64 = vector.broadcast %cst_52 : f32 to vector<2x8xf32>
      %c0_53 = arith.constant 0 : index
      %c0_54 = arith.constant 0 : index
      %65 = vector.load %arg12[%c0_53, %c0_54] : memref<2x8xf32, #tpu.memory_space<vmem>>, vector<2x8xf32>
      tpu.vector_store %arg12[%c0_53, %c0_54], %64 {strides = array<i32>} : memref<2x8xf32, #tpu.memory_space<vmem>>, vector<2x8xf32>,
      %cst_55 = arith.constant 0.000000e+00 : f32
      %66 = vector.broadcast %cst_55 : f32 to vector<2x8xf32>
      %c0_56 = arith.constant 0 : index
      %c0_57 = arith.constant 0 : index
      %67 = vector.load %arg13[%c0_56, %c0_57] : memref<2x8xf32, #tpu.memory_space<vmem>>, vector<2x8xf32>
      tpu.vector_store %arg13[%c0_56, %c0_57], %66 {strides = array<i32>} : memref<2x8xf32, #tpu.memory_space<vmem>>, vector<2x8xf32>,
    } else {
    }
    %c8_i32 = arith.constant 8 : i32
    %3 = arith.muli %arg0, %c8_i32 : i32
    %4 = tpu.iota {dimensions = array<i32: 1>} : vector<2x8xi32>
    %5 = vector.broadcast %3 : i32 to vector<2x8xi32>
    %6 = arith.addi %4, %5 : vector<2x8xi32>
    %c0 = arith.constant 0 : index
    %c0_1 = arith.constant 0 : index
    %7 = vector.load %arg1[%c0, %c0_1] : memref<2x1xi32, #tpu.memory_space<vmem>>, vector<2x1xi32>
    %8 = vector.broadcast %7 : vector<2x1xi32> to vector<2x8xi32>
    %9 = arith.cmpi slt, %6, %8 : vector<2x8xi32>
    %c8_i32_2 = arith.constant 8 : i32
    %10 = vector.broadcast %c8_i32_2 : i32 to vector<2x8xi32>
    %11 = arith.cmpi slt, %6, %10 : vector<2x8xi32>
    %12 = arith.andi %9, %11 : vector<2x8xi1>
    %c0_3 = arith.constant 0 : index
    %c0_4 = arith.constant 0 : index
    %13 = vector.load %arg2[%c0_3, %c0_4] : memref<2x8xf32, #tpu.memory_space<vmem>>, vector<2x8xf32>
    %c0_5 = arith.constant 0 : index
    %c0_6 = arith.constant 0 : index
    %14 = vector.load %arg6[%c0_5, %c0_6] : memref<2x8xf32, #tpu.memory_space<vmem>>, vector<2x8xf32>
    %cst = arith.constant 0.000000e+00 : f32
    %15 = vector.broadcast %cst : f32 to vector<2x8xf32>
    %16 = arith.maximumf %13, %15 : vector<2x8xf32>
    %17 = arith.mulf %13, %14 : vector<2x8xf32>
    %18 = arith.subf %16, %17 : vector<2x8xf32>
    %19 = math.absf %13 : vector<2x8xf32>
    %cst_7 = arith.constant 0.000000e+00 : f32
    %20 = vector.broadcast %cst_7 : f32 to vector<2x8xf32>
    %21 = arith.subf %20, %19 : vector<2x8xf32>
    %22 = math.exp %21 : vector<2x8xf32>
    %23 = math.log1p %22 : vector<2x8xf32>
    %24 = arith.addf %18, %23 : vector<2x8xf32>
    %c0_8 = arith.constant 0 : index
    %c0_9 = arith.constant 0 : index
    %25 = vector.load %arg10[%c0_8, %c0_9] : memref<2x8xf32, #tpu.memory_space<vmem>>, vector<2x8xf32>
    %cst_10 = arith.constant 0.000000e+00 : f32
    %26 = vector.broadcast %cst_10 : f32 to vector<2x8xf32>
    %27 = arith.select %12, %24, %26 : vector<2x8xi1>, vector<2x8xf32>
    %28 = arith.addf %25, %27 : vector<2x8xf32>
    %c0_11 = arith.constant 0 : index
    %c0_12 = arith.constant 0 : index
    %29 = vector.load %arg10[%c0_11, %c0_12] : memref<2x8xf32, #tpu.memory_space<vmem>>, vector<2x8xf32>
    tpu.vector_store %arg10[%c0_11, %c0_12], %28 {strides = array<i32>} : memref<2x8xf32, #tpu.memory_space<vmem>>, vector<2x8xf32>,
    %c0_13 = arith.constant 0 : index
    %c0_14 = arith.constant 0 : index
    %30 = vector.load %arg3[%c0_13, %c0_14] : memref<2x8xf32, #tpu.memory_space<vmem>>, vector<2x8xf32>
    %c0_15 = arith.constant 0 : index
    %c0_16 = arith.constant 0 : index
    %31 = vector.load %arg7[%c0_15, %c0_16] : memref<2x8xf32, #tpu.memory_space<vmem>>, vector<2x8xf32>
    %32 = arith.subf %30, %31 : vector<2x8xf32>
    %c0_17 = arith.constant 0 : index
    %c0_18 = arith.constant 0 : index
    %33 = vector.load %arg11[%c0_17, %c0_18] : memref<2x8xf32, #tpu.memory_space<vmem>>, vector<2x8xf32>
    %34 = arith.mulf %32, %32 : vector<2x8xf32>
    %35 = arith.mulf %34, %14 : vector<2x8xf32>
    %cst_19 = arith.constant 0.000000e+00 : f32
    %36 = vector.broadcast %cst_19 : f32 to vector<2x8xf32>
    %37 = arith.select %12, %35, %36 : vector<2x8xi1>, vector<2x8xf32>
    %38 = arith.addf %33, %37 : vector<2x8xf32>
    %c0_20 = arith.constant 0 : index
    %c0_21 = arith.constant 0 : index
    %39 = vector.load %arg11[%c0_20, %c0_21] : memref<2x8xf32, #tpu.memory_space<vmem>>, vector<2x8xf32>
    tpu.vector_store %arg11[%c0_20, %c0_21], %38 {strides = array<i32>} : memref<2x8xf32, #tpu.memory_space<vmem>>, vector<2x8xf32>,
    %c0_22 = arith.constant 0 : index
    %c0_23 = arith.constant 0 : index
    %c0_24 = arith.constant 0 : index
    %40 = vector.load %arg4[%c0_22, %c0_23, %c0_24] : memref<2x8x32xf32, #tpu.memory_space<vmem>>, vector<2x8x32xf32>
    %c0_25 = arith.constant 0 : index
    %c0_26 = arith.constant 0 : index
    %c0_27 = arith.constant 0 : index
    %41 = vector.load %arg8[%c0_25, %c0_26, %c0_27] : memref<2x8x32xf32, #tpu.memory_space<vmem>>, vector<2x8x32xf32>
    %42 = arith.subf %40, %41 : vector<2x8x32xf32>
    %c0_28 = arith.constant 0 : index
    %c0_29 = arith.constant 0 : index
    %43 = vector.load %arg12[%c0_28, %c0_29] : memref<2x8xf32, #tpu.memory_space<vmem>>, vector<2x8xf32>
    %44 = arith.mulf %42, %42 : vector<2x8x32xf32>
    %cst_30 = arith.constant dense<0.000000e+00> : vector<2x8xf32>
    %45 = vector.multi_reduction <add>, %44, %cst_30 [2] : vector<2x8x32xf32> to vector<2x8xf32>
    %cst_31 = arith.constant 0.000000e+00 : f32
    %46 = vector.broadcast %cst_31 : f32 to vector<2x8xf32>
    %47 = arith.select %12, %45, %46 : vector<2x8xi1>, vector<2x8xf32>
    %48 = arith.addf %43, %47 : vector<2x8xf32>
    %c0_32 = arith.constant 0 : index
    %c0_33 = arith.constant 0 : index
    %49 = vector.load %arg12[%c0_32, %c0_33] : memref<2x8xf32, #tpu.memory_space<vmem>>, vector<2x8xf32>
    tpu.vector_store %arg12[%c0_32, %c0_33], %48 {strides = array<i32>} : memref<2x8xf32, #tpu.memory_space<vmem>>, vector<2x8xf32>,
    %c0_34 = arith.constant 0 : index
    %c0_35 = arith.constant 0 : index
    %c0_36 = arith.constant 0 : index
    %50 = vector.load %arg5[%c0_34, %c0_35, %c0_36] : memref<2x8x4xf32, #tpu.memory_space<vmem>>, vector<2x8x4xf32>
    %c0_37 = arith.constant 0 : index
    %c0_38 = arith.constant 0 : index
    %c0_39 = arith.constant 0 : index
    %51 = vector.load %arg9[%c0_37, %c0_38, %c0_39] : memref<2x8x4xf32, #tpu.memory_space<vmem>>, vector<2x8x4xf32>
    %52 = arith.subf %50, %51 : vector<2x8x4xf32>
    %c0_40 = arith.constant 0 : index
    %c0_41 = arith.constant 0 : index
    %53 = vector.load %arg13[%c0_40, %c0_41] : memref<2x8xf32, #tpu.memory_space<vmem>>, vector<2x8xf32>
    %54 = arith.mulf %52, %52 : vector<2x8x4xf32>
    %cst_42 = arith.constant dense<0.000000e+00> : vector<2x8xf32>
    %55 = vector.multi_reduction <add>, %54, %cst_42 [2] : vector<2x8x4xf32> to vector<2x8xf32>
    %cst_43 = arith.constant 0.000000e+00 : f32
    %56 = vector.broadcast %cst_43 : f32 to vector<2x8xf32>
    %57 = arith.select %12, %55, %56 : vector<2x8xi1>, vector<2x8xf32>
    %58 = arith.addf %53, %57 : vector<2x8xf32>
    %c0_44 = arith.constant 0 : index
    %c0_45 = arith.constant 0 : index
    %59 = vector.load %arg13[%c0_44, %c0_45] : memref<2x8xf32, #tpu.memory_space<vmem>>, vector<2x8xf32>
    tpu.vector_store %arg13[%c0_44, %c0_45], %58 {strides = array<i32>} : memref<2x8xf32, #tpu.memory_space<vmem>>, vector<2x8xf32>,
    return
  }
  func.func @transform_0(%arg0: i32) -> (i32, i32) {
    %c0_i32 = arith.constant 0 : i32
    %c0_i32_0 = arith.constant 0 : i32
    %c0_i32_1 = arith.constant 0 : i32
    return %c0_i32, %c0_i32_0 : i32, i32
  }
  func.func @transform_1(%arg0: i32) -> (i32, i32) {
    %c0_i32 = arith.constant 0 : i32
    %c0_i32_0 = arith.constant 0 : i32
    return %c0_i32, %arg0 : i32, i32
  }
  func.func @transform_2(%arg0: i32) -> (i32, i32) {
    %c0_i32 = arith.constant 0 : i32
    %c0_i32_0 = arith.constant 0 : i32
    return %c0_i32, %arg0 : i32, i32
  }
  func.func @transform_3(%arg0: i32) -> (i32, i32, i32) {
    %c0_i32 = arith.constant 0 : i32
    %c0_i32_0 = arith.constant 0 : i32
    %c0_i32_1 = arith.constant 0 : i32
    return %c0_i32, %arg0, %c0_i32_0 : i32, i32, i32
  }
  func.func @transform_4(%arg0: i32) -> (i32, i32, i32) {
    %c0_i32 = arith.constant 0 : i32
    %c0_i32_0 = arith.constant 0 : i32
    %c0_i32_1 = arith.constant 0 : i32
    return %c0_i32, %arg0, %c0_i32_0 : i32, i32, i32
  }
  func.func @transform_5(%arg0: i32) -> (i32, i32) {
    %c0_i32 = arith.constant 0 : i32
    %c0_i32_0 = arith.constant 0 : i32
    return %c0_i32, %arg0 : i32, i32
  }
  func.func @transform_6(%arg0: i32) -> (i32, i32) {
    %c0_i32 = arith.constant 0 : i32
    %c0_i32_0 = arith.constant 0 : i32
    return %c0_i32, %arg0 : i32, i32
  }
  func.func @transform_7(%arg0: i32) -> (i32, i32, i32) {
    %c0_i32 = arith.constant 0 : i32
    %c0_i32_0 = arith.constant 0 : i32
    %c0_i32_1 = arith.constant 0 : i32
    return %c0_i32, %arg0, %c0_i32_0 : i32, i32, i32
  }
  func.func @transform_8(%arg0: i32) -> (i32, i32, i32) {
    %c0_i32 = arith.constant 0 : i32
    %c0_i32_0 = arith.constant 0 : i32
    %c0_i32_1 = arith.constant 0 : i32
    return %c0_i32, %arg0, %c0_i32_0 : i32, i32, i32
  }
  func.func @transform_9(%arg0: i32) -> (i32, i32) {
    %c0_i32 = arith.constant 0 : i32
    %c0_i32_0 = arith.constant 0 : i32
    %c0_i32_1 = arith.constant 0 : i32
    return %c0_i32, %c0_i32_0 : i32, i32
  }
  func.func @transform_10(%arg0: i32) -> (i32, i32) {
    %c0_i32 = arith.constant 0 : i32
    %c0_i32_0 = arith.constant 0 : i32
    %c0_i32_1 = arith.constant 0 : i32
    return %c0_i32, %c0_i32_0 : i32, i32
  }
  func.func @transform_11(%arg0: i32) -> (i32, i32) {
    %c0_i32 = arith.constant 0 : i32
    %c0_i32_0 = arith.constant 0 : i32
    %c0_i32_1 = arith.constant 0 : i32
    return %c0_i32, %c0_i32_0 : i32, i32
  }
  func.func @transform_12(%arg0: i32) -> (i32, i32) {
    %c0_i32 = arith.constant 0 : i32
    %c0_i32_0 = arith.constant 0 : i32
    %c0_i32_1 = arith.constant 0 : i32
    return %c0_i32, %c0_i32_0 : i32, i32
  }
}

</mosaic_0001>

<llo_original>
// kernel: tpu_custom_call.1
$region0: #{tpu_custom_call.1}
  #allocation0 [shape = 'u32[]', space=smem, size = 0x4, offset = 0x4, fixed_abs, tag = 'smem constant byte address 0x4 - core index']
  #allocation1 [shape = 'u32[144,128]{1,0:T(1,128)}', space=vmem, size = 0x12000, scoped, tag = 'internal scratch']
  %s0 = inlined_call_operand.vmem [shape: s32[2,1], index: 0, kind: input, shape index: {}]
  %s1 = inlined_call_operand.vmem [shape: f32[2,8], index: 1, kind: input, shape index: {}]
  %s2 = inlined_call_operand.vmem [shape: f32[2,8], index: 2, kind: input, shape index: {}]
  %s3 = inlined_call_operand.vmem [shape: f32[2,8,32], index: 3, kind: input, shape index: {}]
  %s4 = inlined_call_operand.vmem [shape: f32[2,8,4], index: 4, kind: input, shape index: {}]
  %s5 = inlined_call_operand.vmem [shape: f32[2,8], index: 5, kind: input, shape index: {}]
  %s6 = inlined_call_operand.vmem [shape: f32[2,8], index: 6, kind: input, shape index: {}]
  %s7 = inlined_call_operand.vmem [shape: f32[2,8,32], index: 7, kind: input, shape index: {}]
  %s8 = inlined_call_operand.vmem [shape: f32[2,8,4], index: 8, kind: input, shape index: {}]
  %s9 = inlined_call_operand.hbm [shape: f32[2,8], index: 9, kind: output, shape index: {0}]
  %s10 = inlined_call_operand.hbm [shape: f32[2,8], index: 10, kind: output, shape index: {1}]
  %s11 = inlined_call_operand.hbm [shape: f32[2,8], index: 11, kind: output, shape index: {2}]
  %s12 = inlined_call_operand.hbm [shape: f32[2,8], index: 12, kind: output, shape index: {3}]
  %13 = xla_tuple %s9, %s10, %s11, %s12
  %s14 = sld [smem:[#allocation0]]
  $region74: #{tpu_custom_call.1} parent=0
    _
  %s16 = ssub.s32 1, %s14
  %s17 = scalar_select 0, %s16, %s14
  $region1: #{tpu_custom_call.1} parent=0
    #allocation2 [shape = 'u8[1024]{0}', space=vmem, size = 0x400, scoped, tag = 'output window, operand 0, single buffered']
    #allocation3 [shape = 's32[1]{0}', space=sflag, size = 0x4, scoped, tag = 'scoped memory for tpu_custom_call.1']
    #allocation4 [shape = 'u8[1024]{0}', space=vmem, size = 0x400, scoped, tag = 'output window, operand 1, single buffered']
    #allocation5 [shape = 's32[1]{0}', space=sflag, size = 0x4, scoped, tag = 'scoped memory for tpu_custom_call.1']
    #allocation6 [shape = 'u8[1024]{0}', space=vmem, size = 0x400, scoped, tag = 'output window, operand 2, single buffered']
    #allocation7 [shape = 'u8[1024]{0}', space=vmem, size = 0x400, scoped, tag = 'output window, operand 3, single buffered']
    #allocation8 [shape = 's32[1]{0}', space=sflag, size = 0x4, scoped, tag = 'scoped memory for tpu_custom_call.1']
    %18 = vsyncpa [#allocation3], 0
    %19 = vsyncpa [#allocation5], 0
    %20 = vsyncpa [#allocation8], 0
    // Predicated region
    $region2: #{tpu_custom_call.1} parent=1 // pred_check
      _
    $region3: #{tpu_custom_call.1} parent=1 // pred_check_branch
      %22 = sbr.rel (0) target = $region5
    $region4: #{tpu_custom_call.1} parent=1 // pred_region
      _
    $region5: #{tpu_custom_call.1} parent=1 // pred_fallthru
      _
    // Predicated region
    $region6: #{tpu_custom_call.1} parent=1 // pred_check
      _
    $region7: #{tpu_custom_call.1} parent=1 // pred_check_branch
      %24 = sbr.rel (0) target = $region9
    $region8: #{tpu_custom_call.1} parent=1 // pred_region
      _
    $region9: #{tpu_custom_call.1} parent=1 // pred_fallthru
      _
    // Predicated region
    $region10: #{tpu_custom_call.1} parent=1 // pred_check
      _
    $region11: #{tpu_custom_call.1} parent=1 // pred_check_branch
      %26 = sbr.rel (0) target = $region13
    $region12: #{tpu_custom_call.1} parent=1 // pred_region
      _
    $region13: #{tpu_custom_call.1} parent=1 // pred_fallthru
      _
    // Predicated region
    $region14: #{tpu_custom_call.1} parent=1 // pred_check
      _
    $region15: #{tpu_custom_call.1} parent=1 // pred_check_branch
      %28 = sbr.rel (0) target = $region17
    $region16: #{tpu_custom_call.1} parent=1 // pred_region
      _
    $region17: #{tpu_custom_call.1} parent=1 // pred_fallthru
      _
    // Predicated region
    $region18: #{tpu_custom_call.1} parent=1 // pred_check
      _
    $region19: #{tpu_custom_call.1} parent=1 // pred_check_branch
      %30 = sbr.rel (0) target = $region21
    $region20: #{tpu_custom_call.1} parent=1 // pred_region
      _
    $region21: #{tpu_custom_call.1} parent=1 // pred_fallthru
      _
    // Predicated region
    $region22: #{tpu_custom_call.1} parent=1 // pred_check
      _
    $region23: #{tpu_custom_call.1} parent=1 // pred_check_branch
      %32 = sbr.rel (0) target = $region25
    $region24: #{tpu_custom_call.1} parent=1 // pred_region
      _
    $region25: #{tpu_custom_call.1} parent=1 // pred_fallthru
      _
    // Predicated region
    $region26: #{tpu_custom_call.1} parent=1 // pred_check
      _
    $region27: #{tpu_custom_call.1} parent=1 // pred_check_branch
      %34 = sbr.rel (0) target = $region29
    $region28: #{tpu_custom_call.1} parent=1 // pred_region
      _
    $region29: #{tpu_custom_call.1} parent=1 // pred_fallthru
      _
    // Predicated region
    $region30: #{tpu_custom_call.1} parent=1 // pred_check
      _
    $region31: #{tpu_custom_call.1} parent=1 // pred_check_branch
      %36 = sbr.rel (0) target = $region33
    $region32: #{tpu_custom_call.1} parent=1 // pred_region
      _
    $region33: #{tpu_custom_call.1} parent=1 // pred_fallthru
      _
    // Predicated region
    $region34: #{tpu_custom_call.1} parent=1 // pred_check
      _
    $region35: #{tpu_custom_call.1} parent=1 // pred_check_branch
      %38 = sbr.rel (0) target = $region37
    $region36: #{tpu_custom_call.1} parent=1 // pred_region
      _
    $region37: #{tpu_custom_call.1} parent=1 // pred_fallthru
      _
    %p39 = scmp.eq.s32.totalorder 0, 0
    // Predicated region
    $region38: #{tpu_custom_call.1} parent=1 // pred_check
      %p40 = pneg %p39
    $region39: #{tpu_custom_call.1} parent=1 // pred_check_branch
      %42 = sbr.rel (%p40) target = $region41
    $region40: #{tpu_custom_call.1} parent=1 // pred_region
      %vm43 = vcmask 58368
      %44 = vst.msk [vmem:[#allocation2] sm:$0x3] %vm43, 0.0
      %45 = vst.msk [vmem:[#allocation4] sm:$0x3] %vm43, 0.0
      %46 = vst.msk [vmem:[#allocation6] sm:$0x3] %vm43, 0.0
      %47 = vst.msk [vmem:[#allocation7] sm:$0x3] %vm43, 0.0
    $region41: #{tpu_custom_call.1} parent=1 // pred_fallthru
      _
    %s48 = smul.u32 0, 8
    %v49 = vlaneseq
    %v50 = vand.u32 %v49, 127
    %v51 = vstv %s48
    %v52 = vadd.s32 %v50, %v51
    %v53 = vld [vmem:[%s0] sm:$0x3]
    %54 = vset.pattern.permute.xlu0 0
    %55 = vperm.xlu0 %54, %v53
    %v56 = vpop.permute.xlu0 %55
    %vm57 = vcmp.lt.s32.totalorder %v52, %v56
    %vm58 = vcmp.lt.s32.totalorder %v52, 8
    %vm59 = vmand %vm57, %vm58
    %v60 = vld [vmem:[%s1] sm:$0x3]
    %v61 = vld [vmem:[%s5] sm:$0x3]
    %v62 = vmax.f32 %v60, 0.0
    %v63 = vmul.f32 %v60, %v61
    %v64 = vsub.f32 %v62, %v63
    %v65 = vand.u32 2147483647, %v60
    %v66 = vsub.f32 0.0, %v65
    %v67 = vmul.f32 %v66, 1.442695
    %v68 = vpow.pop %v67
    %v69 = vadd.f32 %v68, 1.0
    %v70 = vlog2.pop %v69
    %v71 = vmul.f32 %v70, 0.6931472
    %v72 = vmul.f32 -0.5, %v68
    %v73 = vadd.f32 %v72, 1.0
    %v74 = vmul.f32 %v73, %v68
    %v75 = vand.u32 2147483647, %v68
    %vm76 = vcmp.lt.f32.partialorder %v75, 0.0004427343
    %v77 = vsel %vm76, %v74, %v71
    %v78 = vadd.f32 %v64, %v77
    %v79 = vld [vmem:[#allocation2] sm:$0x3]
    %v80 = vsel %vm59, %v78, 0.0
    %v81 = vadd.f32 %v79, %v80
    %vm82 = vcmask 58368
    %83 = vst.msk [vmem:[#allocation2] sm:$0x3] %vm82, %v81
    %v84 = vld [vmem:[%s2] sm:$0x3]
    %v85 = vld [vmem:[%s6] sm:$0x3]
    %v86 = vsub.f32 %v84, %v85
    %v87 = vld [vmem:[#allocation4] sm:$0x3]
    %v88 = vmul.f32 %v86, %v86
    %v89 = vmul.f32 %v88, %v61
    %v90 = vsel %vm59, %v89, 0.0
    %v91 = vadd.f32 %v87, %v90
    %92 = vst.msk [vmem:[#allocation4] sm:$0x3] %vm82, %v91
    %v93 = vld [vmem:[%s3] sm:$0xff]
    %v94 = vld [vmem:[%s3 + $0x8] sm:$0xff]
    %v95 = vld [vmem:[%s7] sm:$0xff]
    %v96 = vld [vmem:[%s7 + $0x8] sm:$0xff]
    %v97 = vsub.f32 %v93, %v95
    %v98 = vsub.f32 %v94, %v96
    %v99 = vld [vmem:[#allocation6] sm:$0x3]
    %v100 = vmul.f32 %v97, %v97
    %v101 = vmul.f32 %v98, %v98
    %vm102 = vcmask 261120
    %v103 = vsel %vm102, %v100, 0.0
    %104 = vadd.xlane.f32.xlu0 %v103
    %v105 = vpop.xlane.xlu0 %104
    %v106 = vsel %vm102, %v101, 0.0
    %107 = vadd.xlane.f32.xlu0 %v106
    %v108 = vpop.xlane.xlu0 %107
    %v111 = vlaneseq
    %v112 = vshrl.u32 %v111, 7
    %v113 = vsub.s32 %v50, %v112
    %v114 = vrot.slane %v105, %v113
    %v115 = vlaneseq
    %v116 = vshrl.u32 %v115, 7
    %v117 = vsub.s32 %v50, %v116
    %v118 = vrot.slane %v108, %v117
    %vm119 = vcmask 1041409
    %v120 = vsel %vm119, %v118, %v114
    %v122 = vsel %vm59, %v120, 0.0
    %v123 = vadd.f32 %v99, %v122
    %124 = vst.msk [vmem:[#allocation6] sm:$0x3] %vm82, %v123
    %v125 = vld [vmem:[%s4] sm:$0xff]
    %v126 = vld [vmem:[%s4 + $0x8] sm:$0xff]
    %v127 = vld [vmem:[%s8] sm:$0xff]
    %v128 = vld [vmem:[%s8 + $0x8] sm:$0xff]
    %v129 = vsub.f32 %v125, %v127
    %v130 = vsub.f32 %v126, %v128
    %v131 = vld [vmem:[#allocation7] sm:$0x3]
    %v132 = vmul.f32 %v129, %v129
    %v133 = vmul.f32 %v130, %v130
    %vm134 = vcmask 31744
    %v135 = vsel %vm134, %v132, 0.0
    %136 = vadd.xlane.f32.xlu0 %v135
    %v137 = vpop.xlane.xlu0 %136
    %v138 = vsel %vm134, %v133, 0.0
    %139 = vadd.xlane.f32.xlu0 %v138
    %v140 = vpop.xlane.xlu0 %139
    %v143 = vlaneseq
    %v144 = vshrl.u32 %v143, 7
    %v145 = vsub.s32 %v50, %v144
    %v146 = vrot.slane %v137, %v145
    %v147 = vlaneseq
    %v148 = vshrl.u32 %v147, 7
    %v149 = vsub.s32 %v50, %v148
    %v150 = vrot.slane %v140, %v149
    %v151 = vsel %vm119, %v150, %v146
    %v153 = vsel %vm59, %v151, 0.0
    %v154 = vadd.f32 %v131, %v153
    %155 = vst.msk [vmem:[#allocation7] sm:$0x3] %vm82, %v154
    // Predicated region
    $region42: #{tpu_custom_call.1} parent=1 // pred_check
      _
    $region43: #{tpu_custom_call.1} parent=1 // pred_check_branch
      %157 = sbr.rel (0) target = $region45
    $region44: #{tpu_custom_call.1} parent=1 // pred_region
      %s159 = ssub.s32 32, 32
      %160 = vsyncadd [#allocation3], %s159
      %s162 = sshll.u32 [#allocation2], 4
      %s163 = int_to_ptr.vmem [resolvable:$true] %s162
      %165 = dma.vmem_to_hbm [thread:$0]  %s163, 32, %s9, [#allocation3]
    $region45: #{tpu_custom_call.1} parent=1 // pred_fallthru
      _
    // Predicated region
    $region46: #{tpu_custom_call.1} parent=1 // pred_check
      _
    $region47: #{tpu_custom_call.1} parent=1 // pred_check_branch
      %167 = sbr.rel (0) target = $region49
    $region48: #{tpu_custom_call.1} parent=1 // pred_region
      %s169 = ssub.s32 32, 32
      %170 = vsyncadd [#allocation5], %s169
      %s172 = sshll.u32 [#allocation4], 4
      %s173 = int_to_ptr.vmem [resolvable:$true] %s172
      %175 = dma.vmem_to_hbm [thread:$0]  %s173, 32, %s10, [#allocation5]
    $region49: #{tpu_custom_call.1} parent=1 // pred_fallthru
      _
    // Predicated region
    $region50: #{tpu_custom_call.1} parent=1 // pred_check
      _
    $region51: #{tpu_custom_call.1} parent=1 // pred_check_branch
      %177 = sbr.rel (0) target = $region53
    $region52: #{tpu_custom_call.1} parent=1 // pred_region
      %s179 = ssub.s32 32, 32
      %180 = vsyncadd [#allocation5], %s179
      %s182 = sshll.u32 [#allocation6], 4
      %s183 = int_to_ptr.vmem [resolvable:$true] %s182
      %185 = dma.vmem_to_hbm [thread:$0]  %s183, 32, %s11, [#allocation5]
    $region53: #{tpu_custom_call.1} parent=1 // pred_fallthru
      _
    // Predicated region
    $region54: #{tpu_custom_call.1} parent=1 // pred_check
      _
    $region55: #{tpu_custom_call.1} parent=1 // pred_check_branch
      %187 = sbr.rel (0) target = $region57
    $region56: #{tpu_custom_call.1} parent=1 // pred_region
      %s189 = ssub.s32 32, 32
      %190 = vsyncadd [#allocation8], %s189
      %s192 = sshll.u32 [#allocation7], 4
      %s193 = int_to_ptr.vmem [resolvable:$true] %s192
      %195 = dma.vmem_to_hbm [thread:$0]  %s193, 32, %s12, [#allocation8]
    $region57: #{tpu_custom_call.1} parent=1 // pred_fallthru
      _
    // Predicated region
    $region58: #{tpu_custom_call.1} parent=1 // pred_check
      _
    $region59: #{tpu_custom_call.1} parent=1 // pred_check_branch
      %197 = sbr.rel (0) target = $region61
    $region60: #{tpu_custom_call.1} parent=1 // pred_region
      %198 = dma.done [#allocation3], 32
    $region61: #{tpu_custom_call.1} parent=1 // pred_fallthru
      _
    // Predicated region
    $region62: #{tpu_custom_call.1} parent=1 // pred_check
      _
    $region63: #{tpu_custom_call.1} parent=1 // pred_check_branch
      %200 = sbr.rel (0) target = $region65
    $region64: #{tpu_custom_call.1} parent=1 // pred_region
      %201 = dma.done [#allocation5], 32
    $region65: #{tpu_custom_call.1} parent=1 // pred_fallthru
      _
    // Predicated region
    $region66: #{tpu_custom_call.1} parent=1 // pred_check
      _
    $region67: #{tpu_custom_call.1} parent=1 // pred_check_branch
      %203 = sbr.rel (0) target = $region69
    $region68: #{tpu_custom_call.1} parent=1 // pred_region
      %204 = dma.done [#allocation5], 32
    $region69: #{tpu_custom_call.1} parent=1 // pred_fallthru
      _
    // Predicated region
    $region70: #{tpu_custom_call.1} parent=1 // pred_check
      _
    $region71: #{tpu_custom_call.1} parent=1 // pred_check_branch
      %206 = sbr.rel (0) target = $region73
    $region72: #{tpu_custom_call.1} parent=1 // pred_region
      %207 = dma.done [#allocation8], 32
    $region73: #{tpu_custom_call.1} parent=1 // pred_fallthru
      _
    %208 = vsyncpa [#allocation3], 1
    %209 = vsyncpa [#allocation5], 1
    %210 = vsyncpa [#allocation8], 1

</llo_original>
